<compile_context>
chip_gen: v6e
topology: v6e:2x2x1
jax: 0.10.0
libtpu: 0.0.40
codegen_flags: <defaults>
</compile_context>

<pallas_src>
import functools

import jax
import jax.numpy as jnp
import numpy as np
from jax.experimental import pallas as pl
from jax.experimental.pallas import tpu as pltpu


def _summary_coverage_kernel(mxu_dtype, inp_ref, tgt_ref, w_ref, b_ref, out_ref):
    # inp_ref: (TB, S, D) VMEM, tgt_ref: (TB, S) VMEM, w_ref: (D, D) VMEM,
    # b_ref: (1, 1) SMEM, out_ref: (TB, S) VMEM.
    TB, S, D = inp_ref.shape

    x_in = inp_ref[...]                               # native input dtype
    x = x_in.astype(jnp.float32)                      # f32 epilogue (v5e-safe)
    t = tgt_ref[...].astype(jnp.float32)              # (TB, S)
    bias = b_ref[0, 0]                                # scalar from SMEM

    # v1 = inputs @ W : a single MXU matmul over all TB*S rows of this tile.
    # (TB, S, D) -> (TB*S, D) is copy-free when S is a multiple of 8 (the
    # sublane tiles line up); mxu_dtype=bf16 gives full-rate MXU on v6e/v7x
    # while accumulation stays f32.
    lhs = x_in.reshape(TB * S, D).astype(mxu_dtype)
    rhs = w_ref[...].astype(mxu_dtype)
    v1 = jnp.dot(lhs, rhs, preferred_element_type=jnp.float32).reshape(TB, S, D)

    # Fused epilogue, same association as the reference:
    #   w2 = (1-t)[:,:,None]*x ; v3 = sum_s w2 ; v = sum_d v1*(v3 - w2) + b
    one_minus_t = 1.0 - t                             # (TB, S)
    w2 = one_minus_t[:, :, None] * x                  # (TB, S, D)   (= v2)
    # For very long S (>=128) this S-reduction could instead be an MXU
    # dot_general ('bs,bsd->bd'); at small S the VPU+sublane reduce is fine.
    v3 = jnp.sum(w2, axis=1)                          # (TB, D)
    u = v3[:, None, :] - w2                           # (TB, S, D)   (= -(v2 - v3))
    v = jnp.sum(v1 * u, axis=-1) + bias               # (TB, S): single D-reduction
    v = jnp.maximum(v, 0.0)
    out_ref[...] = -(t * v)


def _auto_tb(B, S, D, in_itemsize):
    # Whole batch in one grid step for small problems; otherwise fill the MXU
    # M-dim (>= 256 rows per dot) while keeping 2x(input block) + ~4 f32
    # temporaries + 2x W inside a ~28 MiB VMEM budget (under the 32 MiB scoped
    # limit we request, and well inside v7x's 64 MiB physical VMEM).
    if B * S <= 1024:
        return B
    budget = (28 << 20) - 2 * D * D * 4               # leave room for W (x2 buffers)
    per_row = S * D * (2 * in_itemsize + 4 * 4)       # 2x input block + ~4 f32 temps
    tb_cap = max(8, budget // per_row) if budget > 0 else 8
    tb = max(8, -(-256 // S))                         # ceil(256 / S) rows target
    tb = min(tb, tb_cap, B)
    return max(8, (tb // 8) * 8)                      # sublane-aligned


@functools.partial(jax.jit, static_argnames=("tb", "matmul_dtype"))
def summary_coverage(inputs, targets, W, b, *, tb=None, matmul_dtype=None):
    """
    inputs : (B, S, D) float32 (or bfloat16)
    targets: (B, S)    float32
    W      : (D, D)    float32
    b      : (1, 1)    float32
    returns: (B, S)    float32
    """
    B, S, D = inputs.shape

    if tb is None:
        tb = _auto_tb(B, S, D, jnp.dtype(inputs.dtype).itemsize)
    tb = int(tb)
    if tb >= B:
        tb = B                                        # one full-batch block
    else:
        tb = max(8, ((tb + 7) // 8) * 8)              # sublane-aligned tile
        if tb >= B:
            tb = B

    grid_b = pl.cdiv(B, tb)
    b_out = grid_b * tb                               # pad *outputs* only (cheap)

    mxu_dtype = (jnp.dtype(matmul_dtype) if matmul_dtype is not None
                 else jnp.dtype(inputs.dtype))
    kernel = functools.partial(_summary_coverage_kernel, mxu_dtype)

    out = pl.pallas_call(
        kernel,
        out_shape=jax.ShapeDtypeStruct((b_out, S), jnp.float32),
        grid_spec=pltpu.PrefetchScalarGridSpec(
            num_scalar_prefetch=0,
            grid=(grid_b,),
            in_specs=[
                # (tb, S, D) slab of sentence embeddings per step; the tail
                # block may read past B (garbage rows; their outputs land in
                # the padded output rows and are sliced off).  No input pad.
                pl.BlockSpec((tb, S, D), lambda i: (i, 0, 0)),
                pl.BlockSpec((tb, S), lambda i: (i, 0)),
                # W is grid-invariant (constant index_map -> DMA'd once).  For
                # large D on v7x, pin single-buffered via
                # pipeline_mode=pl.Buffered(1) or stage into VMEM scratch.
                pl.BlockSpec((D, D), lambda i: (0, 0)),
                # Scalar bias via the SMEM/scalar path.
                pl.BlockSpec(memory_space=pltpu.MemorySpace.SMEM),
            ],
            out_specs=pl.BlockSpec((tb, S), lambda i: (i, 0)),
        ),
        compiler_params=pltpu.CompilerParams(
            dimension_semantics=("parallel",),        # shard batch tiles across TCs
            vmem_limit_bytes=32 << 20,                # matches _auto_tb sizing
        ),
    )(inputs, targets, W, b)

    return out[:B]


def summary_coverage_ref(inputs, targets, W, b):
    v1 = jnp.einsum("bsd,de->bse", inputs, W)
    v2 = (1.0 - targets)[:, :, None] * inputs
    v3 = jnp.sum(v2, axis=1, keepdims=True)
    v2 = -(v2 - v3)
    v = jnp.sum(v1 * v2, axis=2) + b[0, 0]
    v = jnp.maximum(v, 0.0)
    return -(targets * v)


if __name__ == "__main__":
    # batch, sentences per doc, sentence-embedding dim (small test shapes).
    B, S, D = 12, 8, 32

    key = jax.random.PRNGKey(0)
    k_in, k_tgt, k_w, k_b = jax.random.split(key, 4)

    inputs = jax.random.normal(k_in, (B, S, D), dtype=jnp.float32)
    # targets: per-sentence selection scores in [0, 1) (matches model usage)
    targets = jax.random.uniform(k_tgt, (B, S), dtype=jnp.float32)
    # Parameter init mimicking torch.rand (uniform [0, 1))
    W = jax.random.uniform(k_w, (D, D), dtype=jnp.float32)
    b = jax.random.uniform(k_b, (1, 1), dtype=jnp.float32)

    # tb=8 forces a 2-step "parallel" grid with an unpadded partial tail block
    # (batch rows 12..15 are garbage reads whose outputs land in the padded
    # output rows and are sliced off) — exercises the general tiled, pad-free
    # path even at these small shapes.
    out = summary_coverage(inputs, targets, W, b, tb=8)
    out = jax.block_until_ready(out)

    ref = summary_coverage_ref(inputs, targets, W, b)
    np.testing.assert_allclose(np.asarray(out), np.asarray(ref), rtol=1e-5, atol=1e-5)

    print("KERNEL_OK")
</pallas_src>

<mosaic_0001>
module attributes {stable_mosaic.version = 11 : i64} {
  func.func @_summary_coverage_kernel(%arg0: i32, %arg1: memref<8x8x32xf32, #tpu.memory_space<vmem>>, %arg2: memref<8x8xf32, #tpu.memory_space<vmem>>, %arg3: memref<32x32xf32, #tpu.memory_space<vmem>>, %arg4: memref<1x1xf32, #tpu.memory_space<smem>>, %arg5: memref<8x8xf32, #tpu.memory_space<vmem>>) attributes {dimension_semantics = [#tpu.dimension_semantics<parallel>], iteration_bounds = array<i64: 2>, scalar_prefetch = 0 : i64, scratch_operands = 0 : i64, tpu.core_type = #tpu.core_type<tc>, window_params = [{transform_indices = @transform_0, window_bounds = array<i64: 8, 8, 32>}, {transform_indices = @transform_1, window_bounds = array<i64: 8, 8>}, {pipeline_mode = #tpu.pipeline_mode<synchronous>, transform_indices = @transform_2, window_bounds = array<i64: 32, 32>}, {transform_indices = @transform_3, window_bounds = array<i64: 1, 1>}, {transform_indices = @transform_4, window_bounds = array<i64: 8, 8>}]} {
    %c0 = arith.constant 0 : index
    %c0_0 = arith.constant 0 : index
    %c0_1 = arith.constant 0 : index
    %0 = vector.load %arg1[%c0, %c0_0, %c0_1] : memref<8x8x32xf32, #tpu.memory_space<vmem>>, vector<8x8x32xf32>
    %c0_2 = arith.constant 0 : index
    %c0_3 = arith.constant 0 : index
    %1 = vector.load %arg2[%c0_2, %c0_3] : memref<8x8xf32, #tpu.memory_space<vmem>>, vector<8x8xf32>
    %c0_4 = arith.constant 0 : index
    %c0_5 = arith.constant 0 : index
    %2 = memref.load %arg4[%c0_4, %c0_5] : memref<1x1xf32, #tpu.memory_space<smem>>
    %3 = vector.shape_cast %0 : vector<8x8x32xf32> to vector<64x32xf32>
    %c0_6 = arith.constant 0 : index
    %c0_7 = arith.constant 0 : index
    %4 = vector.load %arg3[%c0_6, %c0_7] : memref<32x32xf32, #tpu.memory_space<vmem>>, vector<32x32xf32>
    %cst = arith.constant dense<0.000000e+00> : vector<64x32xf32>
    %5 = tpu.matmul %3, %4, %cst {dimension_numbers = #tpu.dot_dimension_numbers<[1], [0], [0], [1], [0, 0, 1, 1], [], []>} : vector<64x32xf32>, vector<32x32xf32>, vector<64x32xf32> -> vector<64x32xf32>
    %6 = vector.shape_cast %5 : vector<64x32xf32> to vector<8x8x32xf32>
    %cst_8 = arith.constant 1.000000e+00 : f32
    %7 = vector.broadcast %cst_8 : f32 to vector<8x8xf32>
    %8 = arith.subf %7, %1 : vector<8x8xf32>
    %9 = vector.shape_cast %8 : vector<8x8xf32> to vector<8x8x1xf32>
    %10 = vector.broadcast %9 : vector<8x8x1xf32> to vector<8x8x32xf32>
    %11 = arith.mulf %10, %0 : vector<8x8x32xf32>
    %cst_9 = arith.constant dense<0.000000e+00> : vector<8x32xf32>
    %12 = vector.multi_reduction <add>, %11, %cst_9 [1] : vector<8x8x32xf32> to vector<8x32xf32>
    %13 = vector.shape_cast %12 : vector<8x32xf32> to vector<8x1x32xf32>
    %14 = vector.broadcast %13 : vector<8x1x32xf32> to vector<8x8x32xf32>
    %15 = arith.subf %14, %11 : vector<8x8x32xf32>
    %16 = arith.mulf %6, %15 : vector<8x8x32xf32>
    %cst_10 = arith.constant dense<0.000000e+00> : vector<8x8xf32>
    %17 = vector.multi_reduction <add>, %16, %cst_10 [2] : vector<8x8x32xf32> to vector<8x8xf32>
    %18 = vector.broadcast %2 : f32 to vector<8x8xf32>
    %19 = arith.addf %17, %18 : vector<8x8xf32>
    %cst_11 = arith.constant 0.000000e+00 : f32
    %20 = vector.broadcast %cst_11 : f32 to vector<8x8xf32>
    %21 = arith.maximumf %19, %20 : vector<8x8xf32>
    %22 = arith.mulf %1, %21 : vector<8x8xf32>
    %cst_12 = arith.constant 0.000000e+00 : f32
    %23 = vector.broadcast %cst_12 : f32 to vector<8x8xf32>
    %24 = arith.subf %23, %22 : vector<8x8xf32>
    %c0_13 = arith.constant 0 : index
    %c0_14 = arith.constant 0 : index
    %25 = vector.load %arg5[%c0_13, %c0_14] : memref<8x8xf32, #tpu.memory_space<vmem>>, vector<8x8xf32>
    tpu.vector_store %arg5[%c0_13, %c0_14], %24 {strides = array<i32>} : memref<8x8xf32, #tpu.memory_space<vmem>>, vector<8x8xf32>,
    return
  }
  func.func @transform_0(%arg0: i32) -> (i32, i32, i32) {
    %c0_i32 = arith.constant 0 : i32
    %c0_i32_0 = arith.constant 0 : i32
    %c0_i32_1 = arith.constant 0 : i32
    return %arg0, %c0_i32, %c0_i32_0 : i32, i32, i32
  }
  func.func @transform_1(%arg0: i32) -> (i32, i32) {
    %c0_i32 = arith.constant 0 : i32
    %c0_i32_0 = arith.constant 0 : i32
    return %arg0, %c0_i32 : i32, i32
  }
  func.func @transform_2(%arg0: i32) -> (i32, i32) {
    %c0_i32 = arith.constant 0 : i32
    %c0_i32_0 = arith.constant 0 : i32
    %c0_i32_1 = arith.constant 0 : i32
    return %c0_i32, %c0_i32_0 : i32, i32
  }
  func.func @transform_3(%arg0: i32) -> (i32, i32) {
    %c0_i32 = arith.constant 0 : i32
    %c0_i32_0 = arith.constant 0 : i32
    %c0_i32_1 = arith.constant 0 : i32
    return %c0_i32, %c0_i32_0 : i32, i32
  }
  func.func @transform_4(%arg0: i32) -> (i32, i32) {
    %c0_i32 = arith.constant 0 : i32
    %c0_i32_0 = arith.constant 0 : i32
    return %arg0, %c0_i32 : i32, i32
  }
}

</mosaic_0001>

<llo_original>
// kernel: summary_coverage.1
$region0: #{summary_coverage.1}
  #allocation0 [shape = 'u32[]', space=smem, size = 0x4, offset = 0x4, fixed_abs, tag = 'smem constant byte address 0x4 - core index']
  #allocation1 [shape = 'u32[144,128]{1,0:T(1,128)}', space=vmem, size = 0x12000, scoped, tag = 'internal scratch']
  #allocation2 [shape = 'f32[1,1]{1,0:T(1,128)S(6)}', space=smem, size = 0x200, scoped, tag = 'scoped memory for summary_coverage.1']
  %s0 = inlined_call_operand.hbm [shape: f32[12,8,32], index: 0, kind: input, shape index: {}]
  %s1 = inlined_call_operand.vmem [shape: f32[12,8], index: 1, kind: input, shape index: {}]
  %s2 = inlined_call_operand.hbm [shape: f32[32,32], index: 2, kind: input, shape index: {}]
  %s3 = inlined_call_operand.<no memory space> [shape: f32[1,1], index: 3, kind: input, shape index: {}]
  %s4 = inlined_call_operand.vmem [shape: f32[16,8], index: 4, kind: output, shape index: {}]
  %s5 = sld [smem:[#allocation0]]
  $region57: #{summary_coverage.1} parent=0
    _
  %s7 = ssub.s32 1, %s5
  %s8 = scalar_select 0, %s7, %s5
  %9 = sst [smem:[#allocation2]] %s3
  $region1: #{summary_coverage.1} parent=0
    #allocation3 [shape = 'u8[65536]{0}', space=vmem, size = 0x10000, scoped, tag = 'input window, operand 0']
    #allocation4 [shape = 's32[2]{0}', space=sflag, size = 0x8, scoped, tag = 'scoped memory for summary_coverage.1']
    #allocation5 [shape = 'u8[16384]{0}', space=vmem, size = 0x4000, scoped, tag = 'input window, operand 2, single buffered']
    #allocation6 [shape = 's32[1]{0}', space=sflag, size = 0x4, scoped, tag = 'scoped memory for summary_coverage.1']
    %10 = vsyncpa [#allocation4], 0
    %s11 = scalar_lea.sflag [#allocation4], 1
    %12 = vsyncpa %s11, 0
    %13 = vsyncpa [#allocation6], 0
    loop: start=0, step=1, limit=4
    $region2: #{summary_coverage.1} parent=1 // loop_pre_header
      _
    $region3: #{summary_coverage.1} parent=1 // loop_header
      %s15 = sphi 0, %s19
      %p16 = scmp.ge.s32.totalorder %s15, 4
      %s25 = sphi 0, %s27
      %s28 = sphi 0, %s25
      %s29 = sphi 0, %s28
      %s45 = sphi 0, %s29
      %s51 = sphi 0, %s53
      %s54 = sphi 0, %s51
      %s55 = sphi 0, %s54
      %s71 = sphi 0, %s55
      %s75 = sphi 0, %s75
      %s77 = sphi 0, %s75
      %s78 = sphi 0, %s77
      %s92 = sphi 0, %s78
      %s96 = sphi 0, %s96
      %s98 = sphi 0, %s96
      %s99 = sphi 0, %s98
      %s113 = sphi 0, %s99
      %s119 = sphi 0, %s121
      %s122 = sphi 0, %s119
      %s123 = sphi 0, %s122
      %s139 = sphi 0, %s123
    $region4: #{summary_coverage.1} parent=1 // loop_header_branch
      %18 = sbr.rel (%p16) target = $region8
    $region5: #{summary_coverage.1} parent=1 // loop_body
      %s20 = ssub.s32 %s15, 1
      %s21 = ssub.s32 %s15, 2
      %s22 = sadd.s32 %s15, 1
      %s23 = ssub.s32 %s15, %s22
      %p24 = scmp.eq.s32.totalorder %s23, 0
      %s26 = sadd.s32 %s25, 1
      %s27 = scalar_select %p24, %s25, %s26
      %p30 = pneg %p24
      %p31 = scmp.eq.s32.totalorder %s15, 1
      %p32 = por %p30, %p31
      %p33 = scmp.ne.s32.totalorder %s25, %s28
      %p34 = scmp.eq.s32.totalorder %s15, 0
      %p35 = por %p33, %p34
      %p36 = scmp.ne.s32.totalorder %s25, %s28
      %p37 = scmp.eq.s32.totalorder %s20, 1
      %p38 = por %p36, %p37
      %p39 = scmp.ne.s32.totalorder %s28, %s29
      %p40 = scmp.eq.s32.totalorder %s20, 0
      %p41 = por %p39, %p40
      %p42 = scmp.ne.s32.totalorder %s28, %s29
      %p43 = scmp.eq.s32.totalorder %s21, 1
      %p44 = por %p42, %p43
      %p46 = scmp.ne.s32.totalorder %s29, %s45
      %p47 = scmp.eq.s32.totalorder %s21, 0
      %p48 = por %p46, %p47
      %s49 = ssub.s32 %s15, %s22
      %p50 = scmp.eq.s32.totalorder %s49, 0
      %s52 = sadd.s32 %s51, 1
      %s53 = scalar_select %p50, %s51, %s52
      %p56 = pneg %p50
      %p57 = scmp.eq.s32.totalorder %s15, 1
      %p58 = por %p56, %p57
      %p59 = scmp.ne.s32.totalorder %s51, %s54
      %p60 = scmp.eq.s32.totalorder %s15, 0
      %p61 = por %p59, %p60
      %p62 = scmp.ne.s32.totalorder %s51, %s54
      %p63 = scmp.eq.s32.totalorder %s20, 1
      %p64 = por %p62, %p63
      %p65 = scmp.ne.s32.totalorder %s54, %s55
      %p66 = scmp.eq.s32.totalorder %s20, 0
      %p67 = por %p65, %p66
      %p68 = scmp.ne.s32.totalorder %s54, %s55
      %p69 = scmp.eq.s32.totalorder %s21, 1
      %p70 = por %p68, %p69
      %p72 = scmp.ne.s32.totalorder %s55, %s71
      %p73 = scmp.eq.s32.totalorder %s21, 0
      %p74 = por %p72, %p73
      %s76 = sadd.s32 %s75, 1
      %p79 = scmp.eq.s32.totalorder %s15, 1
      %p80 = scmp.ne.s32.totalorder %s75, %s77
      %p81 = scmp.eq.s32.totalorder %s15, 0
      %p82 = por %p80, %p81
      %p83 = scmp.ne.s32.totalorder %s75, %s77
      %p84 = scmp.eq.s32.totalorder %s20, 1
      %p85 = por %p83, %p84
      %p86 = scmp.ne.s32.totalorder %s77, %s78
      %p87 = scmp.eq.s32.totalorder %s20, 0
      %p88 = por %p86, %p87
      %p89 = scmp.ne.s32.totalorder %s77, %s78
      %p90 = scmp.eq.s32.totalorder %s21, 1
      %p91 = por %p89, %p90
      %p93 = scmp.ne.s32.totalorder %s78, %s92
      %p94 = scmp.eq.s32.totalorder %s21, 0
      %p95 = por %p93, %p94
      %s97 = sadd.s32 %s96, 1
      %p100 = scmp.eq.s32.totalorder %s15, 1
      %p101 = scmp.ne.s32.totalorder %s96, %s98
      %p102 = scmp.eq.s32.totalorder %s15, 0
      %p103 = por %p101, %p102
      %p104 = scmp.ne.s32.totalorder %s96, %s98
      %p105 = scmp.eq.s32.totalorder %s20, 1
      %p106 = por %p104, %p105
      %p107 = scmp.ne.s32.totalorder %s98, %s99
      %p108 = scmp.eq.s32.totalorder %s20, 0
      %p109 = por %p107, %p108
      %p110 = scmp.ne.s32.totalorder %s98, %s99
      %p111 = scmp.eq.s32.totalorder %s21, 1
      %p112 = por %p110, %p111
      %p114 = scmp.ne.s32.totalorder %s99, %s113
      %p115 = scmp.eq.s32.totalorder %s21, 0
      %p116 = por %p114, %p115
      %s117 = ssub.s32 %s15, %s22
      %p118 = scmp.eq.s32.totalorder %s117, 0
      %s120 = sadd.s32 %s119, 1
      %s121 = scalar_select %p118, %s119, %s120
      %p124 = pneg %p118
      %p125 = scmp.eq.s32.totalorder %s15, 1
      %p126 = por %p124, %p125
      %p127 = scmp.ne.s32.totalorder %s119, %s122
      %p128 = scmp.eq.s32.totalorder %s15, 0
      %p129 = por %p127, %p128
      %p130 = scmp.ne.s32.totalorder %s119, %s122
      %p131 = scmp.eq.s32.totalorder %s20, 1
      %p132 = por %p130, %p131
      %p133 = scmp.ne.s32.totalorder %s122, %s123
      %p134 = scmp.eq.s32.totalorder %s20, 0
      %p135 = por %p133, %p134
      %p136 = scmp.ne.s32.totalorder %s122, %s123
      %p137 = scmp.eq.s32.totalorder %s21, 1
      %p138 = por %p136, %p137
      %p140 = scmp.ne.s32.totalorder %s123, %s139
      %p141 = scmp.eq.s32.totalorder %s21, 0
      %p142 = por %p140, %p141
      %p143 = scmp.le.s32.totalorder 1, %s15
      %p144 = scmp.lt.s32.totalorder %s15, 3
      %p145 = pnand %p143, %p144
      %p146 = pneg %p145
      // Predicated region
      $region9: #{summary_coverage.1} parent=5 // pred_check
        _
      $region10: #{summary_coverage.1} parent=5 // pred_check_branch
        %148 = sbr.rel (%p145) target = $region12
      $region11: #{summary_coverage.1} parent=5 // pred_region
        %s149 = ssub.s32 %s15, 1
        // Predicated region
        $region13: #{summary_coverage.1} parent=11 // pred_check
          %p150 = pneg %p88
        $region14: #{summary_coverage.1} parent=11 // pred_check_branch
          %152 = sbr.rel (%p150) target = $region16
        $region15: #{summary_coverage.1} parent=11 // pred_region
          %s154 = ssub.s32 512, 512
          %155 = vsyncadd [#allocation6], %s154
          %s156 = sshll.u32 [#allocation5], 4
          %s157 = int_to_ptr.vmem [resolvable:$true] %s156
          %162 = dma.hbm_to_vmem [thread:$0]  %s2, 512, %s157, [#allocation6], 128, 128, 8
        $region16: #{summary_coverage.1} parent=11 // pred_fallthru
          _
        // Predicated region
        $region17: #{summary_coverage.1} parent=11 // pred_check
          %p163 = pneg %p109
        $region18: #{summary_coverage.1} parent=11 // pred_check_branch
          %165 = sbr.rel (%p163) target = $region20
        $region19: #{summary_coverage.1} parent=11 // pred_region
          _
        $region20: #{summary_coverage.1} parent=11 // pred_fallthru
          _
      $region12: #{summary_coverage.1} parent=5 // pred_fallthru
        _
      %p166 = scmp.lt.s32.totalorder %s15, 2
      // Predicated region
      $region21: #{summary_coverage.1} parent=5 // pred_check
        %p167 = pneg %p166
      $region22: #{summary_coverage.1} parent=5 // pred_check_branch
        %169 = sbr.rel (%p167) target = $region24
      $region23: #{summary_coverage.1} parent=5 // pred_region
        // Predicated region
        $region25: #{summary_coverage.1} parent=23 // pred_check
          %p170 = pneg %p35
        $region26: #{summary_coverage.1} parent=23 // pred_check_branch
          %172 = sbr.rel (%p170) target = $region28
        $region27: #{summary_coverage.1} parent=23 // pred_region
          %s173 = sand.u32 %s25, 1
          %s174 = scalar_lea.sflag [#allocation4], %s173
          %s175 = sand.u32 %s25, 1
          %s176 = smul.addr %s175, 64
          %s177 = scalar_lea.vmem [#allocation3], %s176
          %s178 = smul.u32 8, %s15
          %s179 = ssub.s32 12, %s178
          %p180 = scmp.lt.s32.totalorder %s179, 8
          %s181 = scalar_select %p180, %s179, 8
          %s182 = smul.u32 128, %s181
          %s184 = ssub.s32 1024, %s182
          %185 = vsyncadd %s174, %s184
          %p186 = scmp.ne.s32.totalorder 0, %s182
          %s187 = smul.addr %s178, 128
          %s188 = scalar_lea.hbm %s0, %s187
          %s189 = smul.u32 8, %s181
          %s190 = sshll.u32 %s177, 4
          %s191 = int_to_ptr.vmem [resolvable:$true] %s190
          %s192 = sshll.u32 %s189, 4
          %196 = dma.hbm_to_vmem [thread:$0]  (%p186), %s188, %s192, %s191, %s174, 128, 128, 8
        $region28: #{summary_coverage.1} parent=23 // pred_fallthru
          _
        // Predicated region
        $region29: #{summary_coverage.1} parent=23 // pred_check
          %p197 = pneg %p61
        $region30: #{summary_coverage.1} parent=23 // pred_check_branch
          %199 = sbr.rel (%p197) target = $region32
        $region31: #{summary_coverage.1} parent=23 // pred_region
          %p200 = scmp.lt.s32.totalorder %s15, 1
          %s201 = scalar_select %p200, %s15, 1
          %s202 = smul.addr %s201, 8
          %s203 = scalar_lea.vmem %s1, %s202
        $region32: #{summary_coverage.1} parent=23 // pred_fallthru
          _
      $region24: #{summary_coverage.1} parent=5 // pred_fallthru
        _
      %p204 = scmp.le.s32.totalorder 1, %s15
      %p205 = scmp.lt.s32.totalorder %s15, 3
      %p206 = pnand %p204, %p205
      %p207 = pneg %p206
      // Predicated region
      $region33: #{summary_coverage.1} parent=5 // pred_check
        _
      $region34: #{summary_coverage.1} parent=5 // pred_check_branch
        %209 = sbr.rel (%p206) target = $region36
      $region35: #{summary_coverage.1} parent=5 // pred_region
        %s210 = ssub.s32 %s15, 1
        %s211 = sand.u32 %s28, 1
        %s212 = scalar_lea.sflag [#allocation4], %s211
        %s213 = sand.u32 %s28, 1
        %s214 = smul.addr %s213, 64
        %s215 = scalar_lea.vmem [#allocation3], %s214
        // Predicated region
        $region37: #{summary_coverage.1} parent=35 // pred_check
          %p216 = pneg %p41
        $region38: #{summary_coverage.1} parent=35 // pred_check_branch
          %218 = sbr.rel (%p216) target = $region40
        $region39: #{summary_coverage.1} parent=35 // pred_region
          %219 = dma.done %s212, 1024
        $region40: #{summary_coverage.1} parent=35 // pred_fallthru
          _
        // Predicated region
        $region41: #{summary_coverage.1} parent=35 // pred_check
          %p220 = pneg %p88
        $region42: #{summary_coverage.1} parent=35 // pred_check_branch
          %222 = sbr.rel (%p220) target = $region44
        $region43: #{summary_coverage.1} parent=35 // pred_region
          %223 = dma.done [#allocation6], 512
        $region44: #{summary_coverage.1} parent=35 // pred_fallthru
          _
        %s224 = sand.u32 %s28, 1
        %s225 = scalar_lea.sflag [#allocation4], %s224
        %s226 = sand.u32 %s28, 1
        %s227 = smul.addr %s226, 64
        %s228 = scalar_lea.vmem [#allocation3], %s227
        %p229 = pneg %p41
        %p230 = pneg %p38
        %p231 = scmp.lt.s32.totalorder %s20, 1
        %s232 = scalar_select %p231, %s20, 1
        %s233 = smul.addr %s232, 8
        %s234 = scalar_lea.vmem %s1, %s233
        %p235 = pneg %p67
        %p236 = pneg %p64
        %p237 = pneg %p88
        %p238 = pneg %p85
        %p239 = pneg %p109
        %p240 = pneg %p106
        %p241 = pneg %p135
        %p242 = pneg %p132
        %p243 = scmp.lt.s32.totalorder %s20, 1
        %s244 = scalar_select %p243, %s20, 1
        %s245 = smul.addr %s244, 8
        %s246 = scalar_lea.vmem %s4, %s245
        %s247 = smul.u32 8, %s20
        %s248 = ssub.s32 12, %s247
        %p249 = scmp.lt.s32.totalorder %s248, 8
        %s250 = scalar_select %p249, %s248, 8
        %s251 = smul.u32 128, %s250
        %p252 = scmp.lt.s32.totalorder %s20, 1
        %s253 = scalar_select %p252, %s20, 1
        %s254 = smul.addr %s253, 8
        %s255 = scalar_lea.vmem %s1, %s254
        %p256 = scmp.lt.s32.totalorder %s20, 1
        %s257 = scalar_select %p256, %s20, 1
        %s258 = smul.addr %s257, 8
        %s259 = scalar_lea.vmem %s4, %s258
        %v260 = vld [vmem:[%s215] sm:$0xff]
        %v261 = vld [vmem:[%s215 + $0x8] sm:$0xff]
        %v262 = vld [vmem:[%s215 + $0x10] sm:$0xff]
        %v263 = vld [vmem:[%s215 + $0x18] sm:$0xff]
        %v264 = vld [vmem:[%s215 + $0x20] sm:$0xff]
        %v265 = vld [vmem:[%s215 + $0x28] sm:$0xff]
        %v266 = vld [vmem:[%s215 + $0x30] sm:$0xff]
        %v267 = vld [vmem:[%s215 + $0x38] sm:$0xff]
        %v268 = vld [vmem:[%s255] sm:$0xff]
        %s269 = sld [smem:[#allocation2]]
        %v270 = vld [vmem:[#allocation5] sm:$0xff]
        %v271 = vld [vmem:[#allocation5 + $0x8] sm:$0xff]
        %v272 = vld [vmem:[#allocation5 + $0x10] sm:$0xff]
        %v273 = vld [vmem:[#allocation5 + $0x18] sm:$0xff]
        %vm274 = vcmask 261120
        %v276 = vsel %vm274, %v260, 0
        %v279 = vsel %vm274, %v261, 0
        %v282 = vsel %vm274, %v262, 0
        %v285 = vsel %vm274, %v263, 0
        %v288 = vsel %vm274, %v264, 0
        %v291 = vsel %vm274, %v265, 0
        %v294 = vsel %vm274, %v266, 0
        %v297 = vsel %vm274, %v267, 0
        %299 = vmatprep.subr.mxu0 0.0
        %300 = vmatpush1.msra.mxu0 0.0
        %301 = vmatprep.subr.mxu0 0.0
        %302 = vmatpush1.msra.mxu0 0.0
        %303 = vmatprep.subr.mxu0 0.0
        %304 = vmatpush1.msra.mxu0 0.0
        %305 = vmatprep.subr.mxu0 0.0
        %306 = vmatpush1.msra.mxu0 0.0
        %307 = vmatprep.subr.mxu0 0.0
        %308 = vmatpush1.msra.mxu0 0.0
        %309 = vmatprep.subr.mxu0 0.0
        %310 = vmatpush1.msra.mxu0 0.0
        %311 = vmatprep.subr.mxu0 0.0
        %312 = vmatpush1.msra.mxu0 0.0
        %313 = vmatprep.subr.mxu0 0.0
        %314 = vmatpush1.msra.mxu0 0.0
        %315 = vmatprep.subr.mxu0 0.0
        %316 = vmatpush1.msra.mxu0 0.0
        %317 = vmatprep.subr.mxu0 0.0
        %318 = vmatpush1.msra.mxu0 0.0
        %319 = vmatprep.subr.mxu0 0.0
        %320 = vmatpush1.msra.mxu0 0.0
        %321 = vmatprep.subr.mxu0 0.0
        %322 = vmatpush1.msra.mxu0 0.0
        %323 = vmatprep.subr.mxu0 0.0
        %324 = vmatpush1.msra.mxu0 %v273
        %325 = vmatprep.subr.mxu0 0.0
        %326 = vmatpush1.msra.mxu0 %v272
        %327 = vmatprep.subr.mxu0 0.0
        %328 = vmatpush1.msra.mxu0 %v271
        %329 = vmatprep.subr.mxu0 0.0
        %330 = vmatpush1.msra.mxu0 %v270
        %331 = vmatprep.subr.mxu0 0.0
        %332 = vmatpush2.msra.mxu0 0.0
        %333 = vmatprep.subr.mxu0 0.0
        %334 = vmatpush2.msra.mxu0 0.0
        %335 = vmatprep.subr.mxu0 0.0
        %336 = vmatpush2.msra.mxu0 0.0
        %337 = vmatprep.subr.mxu0 0.0
        %338 = vmatpush2.msra.mxu0 0.0
        %339 = vmatprep.subr.mxu0 0.0
        %340 = vmatpush2.msra.mxu0 0.0
        %341 = vmatprep.subr.mxu0 0.0
        %342 = vmatpush2.msra.mxu0 0.0
        %343 = vmatprep.subr.mxu0 0.0
        %344 = vmatpush2.msra.mxu0 0.0
        %345 = vmatprep.subr.mxu0 0.0
        %346 = vmatpush2.msra.mxu0 0.0
        %347 = vmatprep.subr.mxu0 0.0
        %348 = vmatpush2.msra.mxu0 0.0
        %349 = vmatprep.subr.mxu0 0.0
        %350 = vmatpush2.msra.mxu0 0.0
        %351 = vmatprep.subr.mxu0 0.0
        %352 = vmatpush2.msra.mxu0 0.0
        %353 = vmatprep.subr.mxu0 0.0
        %354 = vmatpush2.msra.mxu0 0.0
        %355 = vmatprep.subr.mxu0 0.0
        %356 = vmatpush2.msra.mxu0 0.0
        %357 = vmatprep.subr.mxu0 0.0
        %358 = vmatpush2.msra.mxu0 0.0
        %359 = vmatprep.subr.mxu0 0.0
        %360 = vmatpush2.msra.mxu0 0.0
        %361 = vmatprep.subr.mxu0 0.0
        %362 = vmatpush2.msra.mxu0 0.0
        %363 = vmatprep.mubr.f32.mxu0 0.0
        %364 = vmatmul.mubr.f32.gmra.mxu0 %v276
        %v365 = vpop.f32.mrf.mxu0
        %v366 = vadd.f32 0.0, %v365
        %v367 = vpop.f32.mrf.mxu0
        %368 = vmatprep.mubr.f32.mxu0 0.0
        %369 = vmatmul.mubr.f32.gmra.mxu0 %v279
        %v370 = vpop.f32.mrf.mxu0
        %v371 = vadd.f32 0.0, %v370
        %v372 = vpop.f32.mrf.mxu0
        %373 = vmatprep.mubr.f32.mxu0 0.0
        %374 = vmatmul.mubr.f32.gmra.mxu0 %v282
        %v375 = vpop.f32.mrf.mxu0
        %v376 = vadd.f32 0.0, %v375
        %v377 = vpop.f32.mrf.mxu0
        %378 = vmatprep.mubr.f32.mxu0 0.0
        %379 = vmatmul.mubr.f32.gmra.mxu0 %v285
        %v380 = vpop.f32.mrf.mxu0
        %v381 = vadd.f32 0.0, %v380
        %v382 = vpop.f32.mrf.mxu0
        %383 = vmatprep.mubr.f32.mxu0 0.0
        %384 = vmatmul.mubr.f32.gmra.mxu0 %v288
        %v385 = vpop.f32.mrf.mxu0
        %v386 = vadd.f32 0.0, %v385
        %v387 = vpop.f32.mrf.mxu0
        %388 = vmatprep.mubr.f32.mxu0 0.0
        %389 = vmatmul.mubr.f32.gmra.mxu0 %v291
        %v390 = vpop.f32.mrf.mxu0
        %v391 = vadd.f32 0.0, %v390
        %v392 = vpop.f32.mrf.mxu0
        %393 = vmatprep.mubr.f32.mxu0 0.0
        %394 = vmatmul.mubr.f32.gmra.mxu0 %v294
        %v395 = vpop.f32.mrf.mxu0
        %v396 = vadd.f32 0.0, %v395
        %v397 = vpop.f32.mrf.mxu0
        %398 = vmatprep.mubr.f32.mxu0 0.0
        %399 = vmatmul.mubr.f32.gmra.mxu0 %v297
        %v400 = vpop.f32.mrf.mxu0
        %v401 = vadd.f32 0.0, %v400
        %v402 = vpop.f32.mrf.mxu0
        %403 = vdwg.mxu0
        %v404 = vsub.f32 1.0, %v268
        %v405 = vlaneseq
        %v406 = vshrl.u32 %v405, 7
        %v407 = vsub.s32 0, %v406
        %v408 = vrot.slane %v404, %v407
        %410 = vbcast.lane.b32.xlu0 %v408, 256
        %v411 = vpop.permute.xlu0 %410
        %v412 = vlaneseq
        %v413 = vshrl.u32 %v412, 7
        %v414 = vsub.s32 1, %v413
        %v415 = vrot.slane %v404, %v414
        %417 = vbcast.lane.b32.xlu0 %v415, 256
        %v418 = vpop.permute.xlu0 %417
        %v419 = vlaneseq
        %v420 = vshrl.u32 %v419, 7
        %v421 = vsub.s32 2, %v420
        %v422 = vrot.slane %v404, %v421
        %424 = vbcast.lane.b32.xlu0 %v422, 256
        %v425 = vpop.permute.xlu0 %424
        %v426 = vlaneseq
        %v427 = vshrl.u32 %v426, 7
        %v428 = vsub.s32 3, %v427
        %v429 = vrot.slane %v404, %v428
        %431 = vbcast.lane.b32.xlu0 %v429, 256
        %v432 = vpop.permute.xlu0 %431
        %v433 = vlaneseq
        %v434 = vshrl.u32 %v433, 7
        %v435 = vsub.s32 4, %v434
        %v436 = vrot.slane %v404, %v435
        %438 = vbcast.lane.b32.xlu0 %v436, 256
        %v439 = vpop.permute.xlu0 %438
        %v440 = vlaneseq
        %v441 = vshrl.u32 %v440, 7
        %v442 = vsub.s32 5, %v441
        %v443 = vrot.slane %v404, %v442
        %445 = vbcast.lane.b32.xlu0 %v443, 256
        %v446 = vpop.permute.xlu0 %445
        %v447 = vlaneseq
        %v448 = vshrl.u32 %v447, 7
        %v449 = vsub.s32 6, %v448
        %v450 = vrot.slane %v404, %v449
        %452 = vbcast.lane.b32.xlu0 %v450, 256
        %v453 = vpop.permute.xlu0 %452
        %v454 = vlaneseq
        %v455 = vshrl.u32 %v454, 7
        %v456 = vsub.s32 7, %v455
        %v457 = vrot.slane %v404, %v456
        %459 = vbcast.lane.b32.xlu0 %v457, 256
        %v460 = vpop.permute.xlu0 %459
        %v461 = vmul.f32 %v411, %v260
        %v462 = vmul.f32 %v418, %v261
        %v463 = vmul.f32 %v425, %v262
        %v464 = vmul.f32 %v432, %v263
        %v465 = vmul.f32 %v439, %v264
        %v466 = vmul.f32 %v446, %v265
        %v467 = vmul.f32 %v453, %v266
        %v468 = vmul.f32 %v460, %v267
        %v469 = vsel %vm274, %v461, 0.0
        %v470 = vrot.slane %v469, 4
        %v471 = vadd.f32 %v469, %v470
        %v472 = vrot.slane %v471, 2
        %v473 = vadd.f32 %v471, %v472
        %v474 = vrot.slane %v473, 1
        %v475 = vadd.f32 %v473, %v474
        %v476 = vsel %vm274, %v462, 0.0
        %v477 = vrot.slane %v476, 4
        %v478 = vadd.f32 %v476, %v477
        %v479 = vrot.slane %v478, 2
        %v480 = vadd.f32 %v478, %v479
        %v481 = vrot.slane %v480, 1
        %v482 = vadd.f32 %v480, %v481
        %v483 = vsel %vm274, %v463, 0.0
        %v484 = vrot.slane %v483, 4
        %v485 = vadd.f32 %v483, %v484
        %v486 = vrot.slane %v485, 2
        %v487 = vadd.f32 %v485, %v486
        %v488 = vrot.slane %v487, 1
        %v489 = vadd.f32 %v487, %v488
        %v490 = vsel %vm274, %v464, 0.0
        %v491 = vrot.slane %v490, 4
        %v492 = vadd.f32 %v490, %v491
        %v493 = vrot.slane %v492, 2
        %v494 = vadd.f32 %v492, %v493
        %v495 = vrot.slane %v494, 1
        %v496 = vadd.f32 %v494, %v495
        %v497 = vsel %vm274, %v465, 0.0
        %v498 = vrot.slane %v497, 4
        %v499 = vadd.f32 %v497, %v498
        %v500 = vrot.slane %v499, 2
        %v501 = vadd.f32 %v499, %v500
        %v502 = vrot.slane %v501, 1
        %v503 = vadd.f32 %v501, %v502
        %v504 = vsel %vm274, %v466, 0.0
        %v505 = vrot.slane %v504, 4
        %v506 = vadd.f32 %v504, %v505
        %v507 = vrot.slane %v506, 2
        %v508 = vadd.f32 %v506, %v507
        %v509 = vrot.slane %v508, 1
        %v510 = vadd.f32 %v508, %v509
        %v511 = vsel %vm274, %v467, 0.0
        %v512 = vrot.slane %v511, 4
        %v513 = vadd.f32 %v511, %v512
        %v514 = vrot.slane %v513, 2
        %v515 = vadd.f32 %v513, %v514
        %v516 = vrot.slane %v515, 1
        %v517 = vadd.f32 %v515, %v516
        %v518 = vsel %vm274, %v468, 0.0
        %v519 = vrot.slane %v518, 4
        %v520 = vadd.f32 %v518, %v519
        %v521 = vrot.slane %v520, 2
        %v522 = vadd.f32 %v520, %v521
        %v523 = vrot.slane %v522, 1
        %v524 = vadd.f32 %v522, %v523
        %v525 = vsub.f32 %v475, %v461
        %v526 = vsub.f32 %v482, %v462
        %v527 = vsub.f32 %v489, %v463
        %v528 = vsub.f32 %v496, %v464
        %v529 = vsub.f32 %v503, %v465
        %v530 = vsub.f32 %v510, %v466
        %v531 = vsub.f32 %v517, %v467
        %v532 = vsub.f32 %v524, %v468
        %v533 = vmul.f32 %v366, %v525
        %v534 = vmul.f32 %v371, %v526
        %v535 = vmul.f32 %v376, %v527
        %v536 = vmul.f32 %v381, %v528
        %v537 = vmul.f32 %v386, %v529
        %v538 = vmul.f32 %v391, %v530
        %v539 = vmul.f32 %v396, %v531
        %v540 = vmul.f32 %v401, %v532
        %v541 = vsel %vm274, %v533, 0.0
        %542 = vadd.xlane.f32.xlu0 %v541
        %v543 = vpop.xlane.xlu0 %542
        %v544 = vsel %vm274, %v534, 0.0
        %545 = vadd.xlane.f32.xlu0 %v544
        %v546 = vpop.xlane.xlu0 %545
        %v547 = vsel %vm274, %v535, 0.0
        %548 = vadd.xlane.f32.xlu0 %v547
        %v549 = vpop.xlane.xlu0 %548
        %v550 = vsel %vm274, %v536, 0.0
        %551 = vadd.xlane.f32.xlu0 %v550
        %v552 = vpop.xlane.xlu0 %551
        %v553 = vsel %vm274, %v537, 0.0
        %554 = vadd.xlane.f32.xlu0 %v553
        %v555 = vpop.xlane.xlu0 %554
        %v556 = vsel %vm274, %v538, 0.0
        %557 = vadd.xlane.f32.xlu0 %v556
        %v558 = vpop.xlane.xlu0 %557
        %v559 = vsel %vm274, %v539, 0.0
        %560 = vadd.xlane.f32.xlu0 %v559
        %v561 = vpop.xlane.xlu0 %560
        %v562 = vsel %vm274, %v540, 0.0
        %563 = vadd.xlane.f32.xlu0 %v562
        %v564 = vpop.xlane.xlu0 %563
        %v565 = vstv %s269
        %v566 = vadd.f32 %v543, %v565
        %v567 = vadd.f32 %v546, %v565
        %v568 = vadd.f32 %v549, %v565
        %v569 = vadd.f32 %v552, %v565
        %v570 = vadd.f32 %v555, %v565
        %v571 = vadd.f32 %v558, %v565
        %v572 = vadd.f32 %v561, %v565
        %v573 = vadd.f32 %v564, %v565
        %v574 = vmax.f32 %v566, 0.0
        %v575 = vmax.f32 %v567, 0.0
        %v576 = vmax.f32 %v568, 0.0
        %v577 = vmax.f32 %v569, 0.0
        %v578 = vmax.f32 %v570, 0.0
        %v579 = vmax.f32 %v571, 0.0
        %v580 = vmax.f32 %v572, 0.0
        %v581 = vmax.f32 %v573, 0.0
        %v590 = vlaneseq
        %v591 = vand.u32 %v590, 127
        %v592 = vlaneseq
        %v593 = vshrl.u32 %v592, 7
        %v594 = vsub.s32 %v591, %v593
        %v595 = vrot.slane %v574, %v594
        %v596 = vlaneseq
        %v597 = vshrl.u32 %v596, 7
        %v598 = vsub.s32 %v591, %v597
        %v599 = vrot.slane %v575, %v598
        %v600 = vlaneseq
        %v601 = vshrl.u32 %v600, 7
        %v602 = vsub.s32 %v591, %v601
        %v603 = vrot.slane %v576, %v602
        %v604 = vlaneseq
        %v605 = vshrl.u32 %v604, 7
        %v606 = vsub.s32 %v591, %v605
        %v607 = vrot.slane %v577, %v606
        %v608 = vlaneseq
        %v609 = vshrl.u32 %v608, 7
        %v610 = vsub.s32 %v591, %v609
        %v611 = vrot.slane %v578, %v610
        %v612 = vlaneseq
        %v613 = vshrl.u32 %v612, 7
        %v614 = vsub.s32 %v591, %v613
        %v615 = vrot.slane %v579, %v614
        %v616 = vlaneseq
        %v617 = vshrl.u32 %v616, 7
        %v618 = vsub.s32 %v591, %v617
        %v619 = vrot.slane %v580, %v618
        %v620 = vlaneseq
        %v621 = vshrl.u32 %v620, 7
        %v622 = vsub.s32 %v591, %v621
        %v623 = vrot.slane %v581, %v622
        %vm624 = vcmask 1041409
        %v625 = vsel %vm624, %v599, %v595
        %vm626 = vcmask 1042434
        %v627 = vsel %vm626, %v603, %v625
        %vm628 = vcmask 1043459
        %v629 = vsel %vm628, %v607, %v627
        %vm630 = vcmask 1044484
        %v631 = vsel %vm630, %v611, %v629
        %vm632 = vcmask 1045509
        %v633 = vsel %vm632, %v615, %v631
        %vm634 = vcmask 1046534
        %v635 = vsel %vm634, %v619, %v633
        %vm636 = vcmask 1047559
        %v637 = vsel %vm636, %v623, %v635
        %v639 = vmul.f32 %v268, %v637
        %v640 = vsub.f32 0.0, %v639
        %vm641 = vcmask 64512
        %642 = vst.msk [vmem:[%s259] sm:$0xff] %vm641, %v640
        %p643 = scmp.lt.s32.totalorder %s20, 1
        %s644 = scalar_select %p643, %s20, 1
        %s645 = smul.addr %s644, 8
        %s646 = scalar_lea.vmem %s4, %s645
        // Predicated region
        $region45: #{summary_coverage.1} parent=35 // pred_check
          %p647 = pneg %p132
        $region46: #{summary_coverage.1} parent=35 // pred_check_branch
          %649 = sbr.rel (%p647) target = $region48
        $region47: #{summary_coverage.1} parent=35 // pred_region
          _
        $region48: #{summary_coverage.1} parent=35 // pred_fallthru
          _
      $region36: #{summary_coverage.1} parent=5 // pred_fallthru
        _
      %p650 = scmp.le.s32.totalorder 2, %s15
      // Predicated region
      $region49: #{summary_coverage.1} parent=5 // pred_check
        %p651 = pneg %p650
      $region50: #{summary_coverage.1} parent=5 // pred_check_branch
        %653 = sbr.rel (%p651) target = $region52
      $region51: #{summary_coverage.1} parent=5 // pred_region
        %s654 = ssub.s32 %s15, 2
        // Predicated region
        $region53: #{summary_coverage.1} parent=51 // pred_check
          %p655 = pneg %p138
        $region54: #{summary_coverage.1} parent=51 // pred_check_branch
          %657 = sbr.rel (%p655) target = $region56
        $region55: #{summary_coverage.1} parent=51 // pred_region
          %p658 = scmp.lt.s32.totalorder %s21, 1
          %s659 = scalar_select %p658, %s21, 1
          %s660 = smul.addr %s659, 8
          %s661 = scalar_lea.vmem %s4, %s660
        $region56: #{summary_coverage.1} parent=51 // pred_fallthru
          _
      $region52: #{summary_coverage.1} parent=5 // pred_fallthru
        _
    $region6: #{summary_coverage.1} parent=1 // loop_footer
      %s19 = sadd.s32 1, %s15
    $region7: #{summary_coverage.1} parent=1 // loop_footer_branch
      %14 = sbr.rel target = $region3
    $region8: #{summary_coverage.1} parent=1 // loop_exit
      _
    %662 = vsyncpa [#allocation4], 1
    %s663 = scalar_lea.sflag [#allocation4], 1
    %664 = vsyncpa %s663, 1
    %665 = vsyncpa [#allocation6], 1

</llo_original>
